<compile_context>
chip_gen: v6e
topology: v6e:2x2x1
jax: 0.10.0
libtpu: 0.0.40
codegen_flags: <defaults>
</compile_context>

<pallas_src>
import jax
import jax.numpy as jnp
from jax.experimental import pallas as pl
from jax.experimental.pallas import tpu as pltpu


def _round_up(x, m):
    return (x + m - 1) // m * m


def _diag_linear_kernel(x_ref, w_ref, b_ref, o_ref):
    # x_ref/o_ref: (tm, tn); w_ref/b_ref: (1, tn), broadcast along the row tile.
    o_ref[...] = (x_ref[...] * w_ref[...] + b_ref[...]).astype(o_ref.dtype)


def _tile_budget_and_vmem_limit(itemsize):
    """Per-tile element budget + scoped-VMEM limit, generation aware."""
    vmem_cap = 64 << 20  # conservative default (v7x per-TensorCore VMEM)
    try:
        info = pltpu.get_tpu_info()
        cap = getattr(info, "vmem_capacity_bytes", None)
        if cap:
            vmem_cap = int(cap)
    except Exception:
        pass
    vmem_limit = int(min(vmem_cap * 3 // 4, 96 << 20))
    # x + out tiles, double-buffered (4 tile buffers) + headroom for w/b.
    tile_budget_bytes = vmem_limit // 6
    return max(1, tile_budget_bytes // itemsize), vmem_limit


def diag_linear(x, weight, bias, *, max_tn=2048, min_pallas_bytes=64 * 1024):
    """y = x * weight + bias (== x @ diagflat(weight) + bias).

    x: (..., N); weight, bias: (N,). Returns same shape/dtype as x.
    """
    orig_shape = x.shape
    N = orig_shape[-1]
    dtype = x.dtype
    itemsize = jnp.dtype(dtype).itemsize
    weight = weight.astype(dtype)
    bias = bias.astype(dtype)

    # Tiny inputs: launch + layout plumbing dominates -> one fused XLA op.
    if x.size * itemsize < min_pallas_bytes:
        return x * weight + bias

    x2 = x.reshape(-1, N)
    M = x2.shape[0]

    lane_pad = 0
    if N < 128 and 128 % N == 0 and (M * N) % 128 == 0:
        # Lane folding: free row-major reshape; avoids reading 128/N x extra
        # lanes and keeps stores full-width.
        fold = 128 // N
        xk = x2.reshape(M * N // 128, 128)
        wk = jnp.tile(weight, fold).reshape(1, 128)
        bk = jnp.tile(bias, fold).reshape(1, 128)
    elif N < 128:
        # Rare ragged narrow case: pad lanes up to 128 only.
        lane_pad = 128 - N
        xk = jnp.pad(x2, ((0, 0), (0, lane_pad)))
        wk = jnp.pad(weight, (0, lane_pad)).reshape(1, 128)
        bk = jnp.pad(bias, (0, lane_pad)).reshape(1, 128)
    else:
        xk = x2
        wk = weight.reshape(1, N)
        bk = bias.reshape(1, N)

    Mk, Nk = xk.shape  # Nk >= 128 in every branch.

    # Lane tile: multiple of 128, never larger than Nk (boundary block masked).
    tn = min(max_tn, (Nk // 128) * 128)
    grid_n = pl.cdiv(Nk, tn)

    # Row tile: dtype-aware sublane multiple, sized by the VMEM budget.
    sub = max(8, 32 // itemsize)  # 8 f32 / 16 bf16 / 32 int8
    budget_elems, vmem_limit = _tile_budget_and_vmem_limit(itemsize)
    tm_cap = max(sub, (budget_elems // tn) // sub * sub)
    tm_full = Mk if Mk < sub else (Mk // sub) * sub
    tm = min(tm_cap, tm_full)
    grid_m = pl.cdiv(Mk, tm)

    # v7x megacore: guarantee >= 2 blocks so both TensorCores get work.
    if grid_m * grid_n == 1 and Mk >= 2 * sub:
        tm = _round_up(pl.cdiv(Mk, 2), sub)
        grid_m = pl.cdiv(Mk, tm)

    out = pl.pallas_call(
        _diag_linear_kernel,
        out_shape=jax.ShapeDtypeStruct((Mk, Nk), dtype),
        grid_spec=pltpu.PrefetchScalarGridSpec(
            num_scalar_prefetch=0,
            grid=(grid_m, grid_n),
            in_specs=[
                pl.BlockSpec((tm, tn), lambda i, j: (i, j)),  # x tile
                pl.BlockSpec((1, tn), lambda i, j: (0, j)),   # weight row
                pl.BlockSpec((1, tn), lambda i, j: (0, j)),   # bias row
            ],
            out_specs=pl.BlockSpec((tm, tn), lambda i, j: (i, j)),
        ),
        compiler_params=pltpu.CompilerParams(
            dimension_semantics=("parallel", "parallel"),
            vmem_limit_bytes=vmem_limit,
        ),
    )(xk, wk, bk)

    if lane_pad:
        out = out[:, :N]
    return out.reshape(orig_shape)


if __name__ == "__main__":
    key = jax.random.PRNGKey(0)
    kw, kb, k1, k2, k3, kw3, kb3, k4 = jax.random.split(key, 8)

    in_size = 32
    # Deterministic parameter init matching uniform_(-0.0001, 0.0001).
    weight = jax.random.uniform(kw, (in_size,), jnp.float32, -0.0001, 0.0001)
    bias = jax.random.uniform(kb, (in_size,), jnp.float32, -0.0001, 0.0001)

    def ref(xv, wv, bv):
        return xv @ jnp.diag(wv.astype(xv.dtype)) + bv.astype(xv.dtype)

    # 1) batch=8, hidden=32 — force the Pallas lane-folding fast path.
    x1 = jax.random.normal(k1, (8, in_size), jnp.float32)
    y1 = diag_linear(x1, weight, bias, min_pallas_bytes=0)
    jax.block_until_ready(y1)
    assert y1.shape == x1.shape
    assert jnp.allclose(y1, ref(x1, weight, bias), atol=1e-6, rtol=1e-6)

    # 2) ragged rows (13, 32) — non-folding, lane pad to 128, cdiv row grid.
    x2 = jax.random.normal(k2, (13, in_size), jnp.float32)
    y2 = diag_linear(x2, weight, bias, min_pallas_bytes=0)
    jax.block_until_ready(y2)
    assert jnp.allclose(y2, ref(x2, weight, bias), atol=1e-6, rtol=1e-6)

    # 3) ragged N >= 128 (300, 160) — no input padding, cdiv on both axes,
    #    passes the default tiny-input threshold.
    w3 = jax.random.uniform(kw3, (160,), jnp.float32, -0.0001, 0.0001)
    b3 = jax.random.uniform(kb3, (160,), jnp.float32, -0.0001, 0.0001)
    x3 = jax.random.normal(k3, (300, 160), jnp.float32)
    y3 = diag_linear(x3, w3, b3)
    jax.block_until_ready(y3)
    assert jnp.allclose(y3, ref(x3, w3, b3), atol=1e-6, rtol=1e-6)

    # 4) mixed dtype (bf16 x, f32 params) — exercises dtype-aware sublanes.
    x4 = jax.random.normal(k4, (128, 256), jnp.float32).astype(jnp.bfloat16)
    w4 = jax.random.uniform(kw3, (256,), jnp.float32, -0.0001, 0.0001)
    b4 = jax.random.uniform(kb3, (256,), jnp.float32, -0.0001, 0.0001)
    y4 = diag_linear(x4, w4, b4, min_pallas_bytes=0)
    jax.block_until_ready(y4)
    y4_ref = x4 * w4.astype(jnp.bfloat16) + b4.astype(jnp.bfloat16)
    assert y4.dtype == x4.dtype
    assert jnp.allclose(y4.astype(jnp.float32), y4_ref.astype(jnp.float32),
                        atol=1e-2, rtol=1e-2)

    # 5) tiny-input fallback path (default threshold, plain fused JAX).
    x5 = jax.random.normal(k1, (2, in_size), jnp.float32)
    y5 = diag_linear(x5, weight, bias)
    jax.block_until_ready(y5)
    assert jnp.allclose(y5, ref(x5, weight, bias), atol=1e-6, rtol=1e-6)

    print("KERNEL_OK")
</pallas_src>

<mosaic_0001>
module attributes {stable_mosaic.version = 11 : i64} {
  func.func @_diag_linear_kernel(%arg0: i32, %arg1: i32, %arg2: memref<2x128xf32, #tpu.memory_space<vmem>>, %arg3: memref<1x128xf32, #tpu.memory_space<vmem>>, %arg4: memref<1x128xf32, #tpu.memory_space<vmem>>, %arg5: memref<2x128xf32, #tpu.memory_space<vmem>>) attributes {dimension_semantics = [#tpu.dimension_semantics<parallel>, #tpu.dimension_semantics<parallel>], iteration_bounds = array<i64: 1, 1>, scalar_prefetch = 0 : i64, scratch_operands = 0 : i64, tpu.core_type = #tpu.core_type<tc>, window_params = [{transform_indices = @transform_0, window_bounds = array<i64: 2, 128>}, {transform_indices = @transform_1, window_bounds = array<i64: 1, 128>}, {transform_indices = @transform_2, window_bounds = array<i64: 1, 128>}, {transform_indices = @transform_3, window_bounds = array<i64: 2, 128>}]} {
    %c0 = arith.constant 0 : index
    %c0_0 = arith.constant 0 : index
    %0 = vector.load %arg2[%c0, %c0_0] : memref<2x128xf32, #tpu.memory_space<vmem>>, vector<2x128xf32>
    %c0_1 = arith.constant 0 : index
    %c0_2 = arith.constant 0 : index
    %1 = vector.load %arg3[%c0_1, %c0_2] : memref<1x128xf32, #tpu.memory_space<vmem>>, vector<1x128xf32>
    %2 = vector.broadcast %1 : vector<1x128xf32> to vector<2x128xf32>
    %3 = arith.mulf %0, %2 : vector<2x128xf32>
    %c0_3 = arith.constant 0 : index
    %c0_4 = arith.constant 0 : index
    %4 = vector.load %arg4[%c0_3, %c0_4] : memref<1x128xf32, #tpu.memory_space<vmem>>, vector<1x128xf32>
    %5 = vector.broadcast %4 : vector<1x128xf32> to vector<2x128xf32>
    %6 = arith.addf %3, %5 : vector<2x128xf32>
    %c0_5 = arith.constant 0 : index
    %c0_6 = arith.constant 0 : index
    %7 = vector.load %arg5[%c0_5, %c0_6] : memref<2x128xf32, #tpu.memory_space<vmem>>, vector<2x128xf32>
    tpu.vector_store %arg5[%c0_5, %c0_6], %6 {strides = array<i32>} : memref<2x128xf32, #tpu.memory_space<vmem>>, vector<2x128xf32>,
    return
  }
  func.func @transform_0(%arg0: i32, %arg1: i32) -> (i32, i32) {
    %c0_i32 = arith.constant 0 : i32
    return %arg0, %arg1 : i32, i32
  }
  func.func @transform_1(%arg0: i32, %arg1: i32) -> (i32, i32) {
    %c0_i32 = arith.constant 0 : i32
    %c0_i32_0 = arith.constant 0 : i32
    return %c0_i32, %arg1 : i32, i32
  }
  func.func @transform_2(%arg0: i32, %arg1: i32) -> (i32, i32) {
    %c0_i32 = arith.constant 0 : i32
    %c0_i32_0 = arith.constant 0 : i32
    return %c0_i32, %arg1 : i32, i32
  }
  func.func @transform_3(%arg0: i32, %arg1: i32) -> (i32, i32) {
    %c0_i32 = arith.constant 0 : i32
    return %arg0, %arg1 : i32, i32
  }
}

</mosaic_0001>

<llo_original>
// kernel: tpu_custom_call.1
$region0: #{tpu_custom_call.1}
  #allocation0 [shape = 'u32[]', space=smem, size = 0x4, offset = 0x4, fixed_abs, tag = 'smem constant byte address 0x4 - core index']
  #allocation1 [shape = 'u32[144,128]{1,0:T(1,128)}', space=vmem, size = 0x12000, scoped, tag = 'internal scratch']
  %s0 = inlined_call_operand.hbm [shape: f32[2,128], index: 0, kind: input, shape index: {}]
  %s1 = inlined_call_operand.vmem [shape: f32[1,128], index: 1, kind: input, shape index: {}]
  %s2 = inlined_call_operand.vmem [shape: f32[1,128], index: 2, kind: input, shape index: {}]
  %s3 = inlined_call_operand.hbm [shape: f32[2,128], index: 3, kind: output, shape index: {}]
  %s4 = sld [smem:[#allocation0]]
  $region26: #{tpu_custom_call.1} parent=0
    _
  %s6 = ssub.s32 1, %s4
  %s7 = scalar_select 0, %s6, %s4
  $region1: #{tpu_custom_call.1} parent=0
    #allocation2 [shape = 'u8[1024]{0}', space=vmem, size = 0x400, scoped, tag = 'input window, operand 0, single buffered']
    #allocation3 [shape = 's32[1]{0}', space=sflag, size = 0x4, scoped, tag = 'scoped memory for tpu_custom_call.1']
    #allocation4 [shape = 's32[1]{0}', space=sflag, size = 0x4, scoped, tag = 'scoped memory for tpu_custom_call.1']
    #allocation5 [shape = 'u8[1024]{0}', space=vmem, size = 0x400, scoped, tag = 'output window, operand 0, single buffered']
    %8 = vsyncpa [#allocation3], 0
    %9 = vsyncpa [#allocation4], 0
    // Predicated region
    $region2: #{tpu_custom_call.1} parent=1 // pred_check
      _
    $region3: #{tpu_custom_call.1} parent=1 // pred_check_branch
      %11 = sbr.rel (0) target = $region5
    $region4: #{tpu_custom_call.1} parent=1 // pred_region
      %s13 = ssub.s32 32, 32
      %14 = vsyncadd [#allocation3], %s13
      %s16 = sshll.u32 [#allocation2], 4
      %s17 = int_to_ptr.vmem [resolvable:$true] %s16
      %19 = dma.hbm_to_vmem [thread:$0]  %s0, 32, %s17, [#allocation3]
    $region5: #{tpu_custom_call.1} parent=1 // pred_fallthru
      _
    // Predicated region
    $region6: #{tpu_custom_call.1} parent=1 // pred_check
      _
    $region7: #{tpu_custom_call.1} parent=1 // pred_check_branch
      %21 = sbr.rel (0) target = $region9
    $region8: #{tpu_custom_call.1} parent=1 // pred_region
      _
    $region9: #{tpu_custom_call.1} parent=1 // pred_fallthru
      _
    // Predicated region
    $region10: #{tpu_custom_call.1} parent=1 // pred_check
      _
    $region11: #{tpu_custom_call.1} parent=1 // pred_check_branch
      %23 = sbr.rel (0) target = $region13
    $region12: #{tpu_custom_call.1} parent=1 // pred_region
      _
    $region13: #{tpu_custom_call.1} parent=1 // pred_fallthru
      _
    // Predicated region
    $region14: #{tpu_custom_call.1} parent=1 // pred_check
      _
    $region15: #{tpu_custom_call.1} parent=1 // pred_check_branch
      %25 = sbr.rel (0) target = $region17
    $region16: #{tpu_custom_call.1} parent=1 // pred_region
      %26 = dma.done [#allocation3], 32
    $region17: #{tpu_custom_call.1} parent=1 // pred_fallthru
      _
    %v27 = vld [vmem:[#allocation2] sm:$0x3]
    %v28 = vld [vmem:[%s1] sm:$0x1]
    %v30 = vlaneseq
    %v31 = vshrl.u32 %v30, 7
    %v32 = vsub.s32 0, %v31
    %v33 = vrot.slane %v28, %v32
    %v35 = vmul.f32 %v27, %v33
    %v36 = vld [vmem:[%s2] sm:$0x1]
    %v38 = vlaneseq
    %v39 = vshrl.u32 %v38, 7
    %v40 = vsub.s32 0, %v39
    %v41 = vrot.slane %v36, %v40
    %v43 = vadd.f32 %v35, %v41
    %44 = vst [vmem:[#allocation5] sm:$0x3] %v43
    // Predicated region
    $region18: #{tpu_custom_call.1} parent=1 // pred_check
      _
    $region19: #{tpu_custom_call.1} parent=1 // pred_check_branch
      %46 = sbr.rel (0) target = $region21
    $region20: #{tpu_custom_call.1} parent=1 // pred_region
      %s48 = ssub.s32 32, 32
      %49 = vsyncadd [#allocation4], %s48
      %s51 = sshll.u32 [#allocation5], 4
      %s52 = int_to_ptr.vmem [resolvable:$true] %s51
      %54 = dma.vmem_to_hbm [thread:$0]  %s52, 32, %s3, [#allocation4]
    $region21: #{tpu_custom_call.1} parent=1 // pred_fallthru
      _
    // Predicated region
    $region22: #{tpu_custom_call.1} parent=1 // pred_check
      _
    $region23: #{tpu_custom_call.1} parent=1 // pred_check_branch
      %56 = sbr.rel (0) target = $region25
    $region24: #{tpu_custom_call.1} parent=1 // pred_region
      %57 = dma.done [#allocation4], 32
    $region25: #{tpu_custom_call.1} parent=1 // pred_fallthru
      _
    %58 = vsyncpa [#allocation3], 1
    %59 = vsyncpa [#allocation4], 1

</llo_original>
